<compile_context>
chip_gen: v6e
topology: v6e:2x2x1
jax: 0.10.0
libtpu: 0.0.40
codegen_flags: <defaults>
</compile_context>

<pallas_src>
import functools

import jax
import jax.numpy as jnp
from jax.experimental import pallas as pl
from jax.experimental.pallas import tpu as pltpu

GEM_EPS = 1e-6
L2_EPS = 1e-12
MAX_POW_UNROLL = 8


def _round_up(x, m):
    return (x + m - 1) // m * m


def _cdiv(a, b):
    return (a + b - 1) // b


def _pick_tb(n):
    """Largest divisor of n (<= 8) that still gives >= 2 batch-grid steps (v7x megacore)."""
    divisors = [d for d in range(1, min(n, 8) + 1) if n % d == 0]
    multi = [d for d in divisors if n // d >= 2]
    return max(multi) if multi else max(divisors)


def _make_kernel(*, tb, rc, n_inner, tr, kdim, c_pad, c_out, r_out, hw, p, mask_rows):
    """Fused conv(as one K=9*C_in dot) + ReLU + GeM + L2 kernel. All sizes/p static."""
    p = float(p)
    int_pow = p.is_integer() and 1 <= int(p) <= MAX_POW_UNROLL
    inv_hw = 1.0 / float(hw)

    def kernel(x_ref, w_ref, b_ref, o_ref, acc_ref):
        # x_ref  : VMEM (1, tb, tr, kdim)  bf16/f32  -- streamed im2col row slab
        # w_ref  : VMEM (kdim, c_pad)      bf16/f32  -- conv weight (resident)
        # b_ref  : VMEM (1, c_pad)         f32       -- conv bias   (resident)
        # o_ref  : VMEM (1, tb, c_pad)     f32       -- L2-normalized GeM descriptor
        # acc_ref: VMEM (tb, c_pad)        f32       -- running sum of clamp(feat,eps)**p
        rt = pl.program_id(1)

        @pl.when(rt == 0)
        def _():
            acc_ref[...] = jnp.zeros_like(acc_ref)

        w = w_ref[...]
        bias = b_ref[...]

        def chunk_body(i, part):
            # One row sub-chunk: bounded live range (rc*tb rows of f32 intermediate).
            r0 = i * rc
            if not isinstance(r0, int):
                r0 = pl.multiple_of(r0, 8)
            xs = x_ref[:, :, pl.ds(r0, rc), :]                # (1, tb, rc, kdim)
            lhs = xs.reshape(tb * rc, kdim)
            feat = jnp.dot(lhs, w, preferred_element_type=jnp.float32)
            feat = jnp.maximum(feat + bias, 0.0)              # conv bias + backbone ReLU
            clamped = jnp.maximum(feat, GEM_EPS)              # GeM clamp(min=eps)
            if int_pow:                                       # p == 3 fast path: VALU only
                powed = clamped
                for _ in range(int(p) - 1):
                    powed = powed * clamped
            else:                                             # static non-integer exponent
                powed = clamped ** p
            powed = powed.reshape(tb, rc, c_pad)
            if mask_rows:
                # Only rows padded up to the tile multiple are invalid; iota compare,
                # no modulo. Keeps the GeM mean divisor exactly H*W.
                gid = rt * tr + r0 + jax.lax.broadcasted_iota(jnp.int32, (rc, 1), 0)
                powed = jnp.where((gid < r_out)[None, :, :], powed, 0.0)
            return part + jnp.sum(powed, axis=1)              # (tb, c_pad)

        zero = jnp.zeros((tb, c_pad), jnp.float32)
        if n_inner == 1:
            part = chunk_body(0, zero)
        else:
            part = jax.lax.fori_loop(0, n_inner, chunk_body, zero)
        acc_ref[...] += part

        @pl.when(rt == pl.num_programs(1) - 1)
        def _():
            # Output block index is constant over the 'arbitrary' row axis, so this
            # single final write is the block that gets written back (accumulator P3).
            pooled = acc_ref[...] * inv_hw                    # global average over H*W
            gem = pooled if p == 1.0 else pooled ** (1.0 / p)  # GeM root
            if c_pad != c_out:
                ch = jax.lax.broadcasted_iota(jnp.int32, (1, c_pad), 1)
                gem = jnp.where(ch < c_out, gem, 0.0)         # drop padded channels
            nrm = jnp.sqrt(jnp.sum(gem * gem, axis=-1, keepdims=True))
            inv = pl.reciprocal(jnp.maximum(nrm, L2_EPS), approx=False)
            o_ref[...] = (gem * inv)[None].astype(o_ref.dtype)  # lane-dense store

    return kernel


@functools.partial(jax.jit, static_argnames=("p", "bf16_matmul"))
def basenet_forward(x_nchw, conv_w, conv_b, p=3.0, bf16_matmul=True):
    """BaseNet forward: conv3x3+ReLU -> GeM(p) -> L2 normalize. Returns (N, C_out) f32.

    bf16_matmul=True (default) runs the conv contraction with bf16 operands / f32
    accumulation (accepted approximation); False keeps f32 operands.
    """
    n, c_in, h, w = x_nchw.shape
    c_out = conv_w.shape[0]
    r_out = h * w
    kdim = 9 * c_in
    c_pad = _round_up(c_out, 128)        # lane-dense matmul N / unmasked output stores
    in_dtype = jnp.bfloat16 if bf16_matmul else jnp.float32

    # --- wrapper-side tap pre-interleave (im2col): (n, h*w, 9*c_in), minor order (kh,kw,ci)
    x_nhwc = jnp.transpose(x_nchw, (0, 2, 3, 1)).astype(jnp.float32)
    xpad = jnp.pad(x_nhwc, ((0, 0), (1, 1), (1, 1), (0, 0)))           # SAME padding
    taps = [xpad[:, kh:kh + h, kw:kw + w, :] for kh in range(3) for kw in range(3)]
    patches = jnp.concatenate(taps, axis=-1).reshape(n, r_out, kdim).astype(in_dtype)

    # --- tiling
    tb = _pick_tb(n)                          # no batch padding; >=2 parallel steps if n>=2
    n_bt = n // tb
    rc = min(_round_up(r_out, 8), max(8, _round_up(max(1, 512 // tb), 8)))  # rows / chunk
    n_inner = min(8, _cdiv(r_out, rc))        # chunks per grid step (amortize step overhead)
    tr = rc * n_inner                         # rows per grid step (streamed slab)
    n_rt = _cdiv(r_out, tr)
    r_pad = n_rt * tr
    mask_rows = r_pad != r_out
    assert n_bt * tb == n and tr % rc == 0 and r_pad % tr == 0 and rc % 8 == 0

    if mask_rows:
        patches = jnp.pad(patches, ((0, 0), (0, r_pad - r_out), (0, 0)))
    patches = patches.reshape(n_bt, tb, r_pad, kdim)

    # --- conv weight (C_out, C_in, 3, 3) -> (9*C_in, C_pad); row order matches patches.
    wmat = jnp.transpose(conv_w, (2, 3, 1, 0)).reshape(kdim, c_out)
    wmat = jnp.pad(wmat, ((0, 0), (0, c_pad - c_out))).astype(in_dtype)
    bias = jnp.pad(conv_b.astype(jnp.float32).reshape(1, c_out),
                   ((0, 0), (0, c_pad - c_out)))

    kernel = _make_kernel(tb=tb, rc=rc, n_inner=n_inner, tr=tr, kdim=kdim,
                          c_pad=c_pad, c_out=c_out, r_out=r_out, hw=r_out,
                          p=p, mask_rows=mask_rows)

    grid_spec = pltpu.PrefetchScalarGridSpec(
        num_scalar_prefetch=0,
        grid=(n_bt, n_rt),
        in_specs=[
            # streamed row slab: block advances with the row-grid axis (O(tr) VMEM)
            pl.BlockSpec((1, tb, tr, kdim), lambda b, r: (b, 0, r, 0)),
            pl.BlockSpec((kdim, c_pad), lambda b, r: (0, 0)),   # weights: resident
            pl.BlockSpec((1, c_pad), lambda b, r: (0, 0)),      # bias:    resident
        ],
        out_specs=pl.BlockSpec((1, tb, c_pad), lambda b, r: (b, 0, 0)),
        scratch_shapes=[pltpu.VMEM((tb, c_pad), jnp.float32)],
    )

    itemsize = 2 if bf16_matmul else 4
    cost = pl.CostEstimate(
        flops=2 * n * r_pad * kdim * c_pad,
        transcendentals=n * c_pad,
        bytes_accessed=(n * r_pad * kdim * itemsize + kdim * c_pad * itemsize
                        + c_pad * 4 + n * c_pad * 4),
    )

    out = pl.pallas_call(
        kernel,
        out_shape=jax.ShapeDtypeStruct((n_bt, tb, c_pad), jnp.float32),
        grid_spec=grid_spec,
        compiler_params=pltpu.CompilerParams(
            dimension_semantics=("parallel", "arbitrary"),
            # Actual use is ~2-4 MiB (double-buffered slab + weights + chunk temps);
            # 32 MiB cap is safe on v5e (128 MiB), v6e (128 MiB) and v7x (64 MiB).
            vmem_limit_bytes=32 * 1024 * 1024,
        ),
        cost_estimate=cost,
    )(patches, wmat, bias)

    return out.reshape(n, c_pad)[:, :c_out]


def _reference(x_nchw, conv_w, conv_b, p, bf16_matmul):
    """Pure-JAX reference mirroring the PyTorch forward (optionally bf16 conv operands)."""
    xd = x_nchw.astype(jnp.float32)
    wd = conv_w.astype(jnp.float32)
    if bf16_matmul:
        xd = xd.astype(jnp.bfloat16)
        wd = wd.astype(jnp.bfloat16)
    out = jax.lax.conv_general_dilated(
        xd, wd, window_strides=(1, 1), padding="SAME",
        dimension_numbers=("NCHW", "OIHW", "NCHW"),
        preferred_element_type=jnp.float32)
    out = out + conv_b.astype(jnp.float32)[None, :, None, None]
    out = jnp.maximum(out, 0.0)                                     # backbone ReLU
    clamped = jnp.maximum(out, GEM_EPS)
    pooled = jnp.mean(clamped ** p, axis=(2, 3)) ** (1.0 / p)       # GeM + squeeze
    nrm = jnp.sqrt(jnp.sum(pooled ** 2, axis=1, keepdims=True))
    return pooled / jnp.maximum(nrm, L2_EPS)                        # F.normalize (L2)


if __name__ == "__main__":
    key = jax.random.PRNGKey(0)
    k_w, k_b, k_x = jax.random.split(key, 3)

    # Small shapes consistent with the module.
    N, C_IN, H, W = 2, 4, 16, 16
    C_OUT = 32      # feature_length (backbone's last parameter == conv bias length)
    P = 3.0         # GeM p (nn.Parameter init value)

    conv_w = jax.random.normal(k_w, (C_OUT, C_IN, 3, 3), jnp.float32) * 0.1
    conv_b = jax.random.normal(k_b, (C_OUT,), jnp.float32) * 0.1
    x = jax.random.normal(k_x, (N, C_IN, H, W), jnp.float32)

    out = basenet_forward(x, conv_w, conv_b, p=P)
    jax.block_until_ready(out)
    assert out.shape == (N, C_OUT)

    ref_bf16 = _reference(x, conv_w, conv_b, P, bf16_matmul=True)   # kernel-matched numerics
    ref_f32 = _reference(x, conv_w, conv_b, P, bf16_matmul=False)   # exact PyTorch semantics
    assert jnp.allclose(out, ref_bf16, atol=3e-3, rtol=3e-3)
    assert jnp.allclose(out, ref_f32, atol=2e-2, rtol=2e-2)

    # Exact-f32 contraction path (bf16 approximation gated off behind the flag).
    out_f32 = basenet_forward(x, conv_w, conv_b, p=P, bf16_matmul=False)
    jax.block_until_ready(out_f32)
    assert jnp.allclose(out_f32, ref_f32, atol=1e-4, rtol=1e-4)

    print("KERNEL_OK")
</pallas_src>

<mosaic_0001>
module attributes {stable_mosaic.version = 11 : i64} {
  func.func @kernel(%arg0: i32, %arg1: i32, %arg2: memref<1x1x256x36xbf16, #tpu.memory_space<vmem>>, %arg3: memref<36x128xbf16, #tpu.memory_space<vmem>>, %arg4: memref<1x128xf32, #tpu.memory_space<vmem>>, %arg5: memref<1x1x128xf32, #tpu.memory_space<vmem>>, %arg6: memref<1x128xf32, #tpu.memory_space<vmem>>) attributes {dimension_semantics = [#tpu.dimension_semantics<parallel>, #tpu.dimension_semantics<arbitrary>], iteration_bounds = array<i64: 2, 1>, scalar_prefetch = 0 : i64, scratch_operands = 1 : i64, tpu.core_type = #tpu.core_type<tc>, window_params = [{transform_indices = @transform_0, window_bounds = array<i64: 1, 1, 256, 36>}, {pipeline_mode = #tpu.pipeline_mode<synchronous>, transform_indices = @transform_1, window_bounds = array<i64: 36, 128>}, {pipeline_mode = #tpu.pipeline_mode<synchronous>, transform_indices = @transform_2, window_bounds = array<i64: 1, 128>}, {transform_indices = @transform_3, window_bounds = array<i64: 1, 1, 128>}]} {
    %c0_i32 = arith.constant 0 : i32
    %0 = arith.cmpi eq, %arg1, %c0_i32 : i32
    %1 = arith.extui %0 : i1 to i32
    %c0_i32_0 = arith.constant 0 : i32
    %2 = arith.cmpi ne, %1, %c0_i32_0 : i32
    scf.if %2 {
      %cst_18 = arith.constant 0.000000e+00 : f32
      %26 = vector.broadcast %cst_18 : f32 to vector<1x128xf32>
      %c0_19 = arith.constant 0 : index
      %c0_20 = arith.constant 0 : index
      %27 = vector.load %arg6[%c0_19, %c0_20] : memref<1x128xf32, #tpu.memory_space<vmem>>, vector<1x128xf32>
      tpu.vector_store %arg6[%c0_19, %c0_20], %26 {strides = array<i32>} : memref<1x128xf32, #tpu.memory_space<vmem>>, vector<1x128xf32>,
    } else {
    }
    %c0 = arith.constant 0 : index
    %c0_1 = arith.constant 0 : index
    %3 = vector.load %arg3[%c0, %c0_1] : memref<36x128xbf16, #tpu.memory_space<vmem>>, vector<36x128xbf16>
    %c0_2 = arith.constant 0 : index
    %c0_3 = arith.constant 0 : index
    %4 = vector.load %arg4[%c0_2, %c0_3] : memref<1x128xf32, #tpu.memory_space<vmem>>, vector<1x128xf32>
    %cst = arith.constant 0.000000e+00 : f32
    %5 = vector.broadcast %cst : f32 to vector<1x128xf32>
    %c0_4 = arith.constant 0 : index
    %c0_5 = arith.constant 0 : index
    %c0_6 = arith.constant 0 : index
    %c0_7 = arith.constant 0 : index
    %6 = vector.load %arg2[%c0_4, %c0_5, %c0_6, %c0_7] : memref<1x1x256x36xbf16, #tpu.memory_space<vmem>>, vector<1x1x256x36xbf16>
    %7 = vector.shape_cast %6 : vector<1x1x256x36xbf16> to vector<256x36xbf16>
    %cst_8 = arith.constant dense<0.000000e+00> : vector<256x128xf32>
    %8 = tpu.matmul %7, %3, %cst_8 {dimension_numbers = #tpu.dot_dimension_numbers<[1], [0], [0], [1], [0, 0, 1, 1], [], []>} : vector<256x36xbf16>, vector<36x128xbf16>, vector<256x128xf32> -> vector<256x128xf32>
    %9 = vector.broadcast %4 : vector<1x128xf32> to vector<256x128xf32>
    %10 = arith.addf %8, %9 : vector<256x128xf32>
    %cst_9 = arith.constant 0.000000e+00 : f32
    %11 = vector.broadcast %cst_9 : f32 to vector<256x128xf32>
    %12 = arith.maximumf %10, %11 : vector<256x128xf32>
    %cst_10 = arith.constant 9.99999997E-7 : f32
    %13 = vector.broadcast %cst_10 : f32 to vector<256x128xf32>
    %14 = arith.maximumf %12, %13 : vector<256x128xf32>
    %15 = arith.mulf %14, %14 : vector<256x128xf32>
    %16 = arith.mulf %15, %14 : vector<256x128xf32>
    %17 = vector.shape_cast %16 : vector<256x128xf32> to vector<1x256x128xf32>
    %cst_11 = arith.constant dense<0.000000e+00> : vector<1x128xf32>
    %18 = vector.multi_reduction <add>, %17, %cst_11 [1] : vector<1x256x128xf32> to vector<1x128xf32>
    %19 = arith.addf %5, %18 : vector<1x128xf32>
    %c0_12 = arith.constant 0 : index
    %c0_13 = arith.constant 0 : index
    %20 = vector.load %arg6[%c0_12, %c0_13] : memref<1x128xf32, #tpu.memory_space<vmem>>, vector<1x128xf32>
    %21 = arith.addf %20, %19 : vector<1x128xf32>
    %c0_14 = arith.constant 0 : index
    %c0_15 = arith.constant 0 : index
    %22 = vector.load %arg6[%c0_14, %c0_15] : memref<1x128xf32, #tpu.memory_space<vmem>>, vector<1x128xf32>
    tpu.vector_store %arg6[%c0_14, %c0_15], %21 {strides = array<i32>} : memref<1x128xf32, #tpu.memory_space<vmem>>, vector<1x128xf32>,
    %c0_i32_16 = arith.constant 0 : i32
    %23 = arith.cmpi eq, %arg1, %c0_i32_16 : i32
    %24 = arith.extui %23 : i1 to i32
    %c0_i32_17 = arith.constant 0 : i32
    %25 = arith.cmpi ne, %24, %c0_i32_17 : i32
    scf.if %25 {
      %c0_18 = arith.constant 0 : index
      %c0_19 = arith.constant 0 : index
      %26 = vector.load %arg6[%c0_18, %c0_19] : memref<1x128xf32, #tpu.memory_space<vmem>>, vector<1x128xf32>
      %cst_20 = arith.constant 3.906250e-03 : f32
      %27 = vector.broadcast %cst_20 : f32 to vector<1x128xf32>
      %28 = arith.mulf %26, %27 : vector<1x128xf32>
      %cst_21 = arith.constant 0.333333343 : f32
      %29 = vector.broadcast %cst_21 : f32 to vector<1x128xf32>
      %30 = math.powf %28, %29 : vector<1x128xf32>
      %31 = tpu.iota {dimensions = array<i32: 1>} : vector<1x128xi32>
      %c32_i32 = arith.constant 32 : i32
      %32 = vector.broadcast %c32_i32 : i32 to vector<1x128xi32>
      %33 = arith.cmpi slt, %31, %32 : vector<1x128xi32>
      %cst_22 = arith.constant 0.000000e+00 : f32
      %34 = vector.broadcast %cst_22 : f32 to vector<1x128xf32>
      %35 = arith.select %33, %30, %34 : vector<1x128xi1>, vector<1x128xf32>
      %36 = arith.mulf %35, %35 : vector<1x128xf32>
      %cst_23 = arith.constant dense<0.000000e+00> : vector<1xf32>
      %37 = vector.multi_reduction <add>, %36, %cst_23 [1] : vector<1x128xf32> to vector<1xf32>
      %38 = vector.shape_cast %37 : vector<1xf32> to vector<1x1xf32>
      %39 = math.sqrt %38 : vector<1x1xf32>
      %cst_24 = arith.constant 9.99999996E-13 : f32
      %40 = vector.broadcast %cst_24 : f32 to vector<1x1xf32>
      %41 = arith.maximumf %39, %40 : vector<1x1xf32>
      %42 = tpu.reciprocal %41 : vector<1x1xf32> -> vector<1x1xf32>
      %43 = vector.broadcast %42 : vector<1x1xf32> to vector<1x128xf32>
      %44 = arith.mulf %35, %43 : vector<1x128xf32>
      %45 = vector.shape_cast %44 : vector<1x128xf32> to vector<1x1x128xf32>
      %c0_25 = arith.constant 0 : index
      %c0_26 = arith.constant 0 : index
      %c0_27 = arith.constant 0 : index
      %46 = vector.load %arg5[%c0_25, %c0_26, %c0_27] : memref<1x1x128xf32, #tpu.memory_space<vmem>>, vector<1x1x128xf32>
      tpu.vector_store %arg5[%c0_25, %c0_26, %c0_27], %45 {strides = array<i32>} : memref<1x1x128xf32, #tpu.memory_space<vmem>>, vector<1x1x128xf32>,
    } else {
    }
    return
  }
  func.func @transform_0(%arg0: i32, %arg1: i32) -> (i32, i32, i32, i32) {
    %c0_i32 = arith.constant 0 : i32
    %c0_i32_0 = arith.constant 0 : i32
    %c0_i32_1 = arith.constant 0 : i32
    return %arg0, %c0_i32, %arg1, %c0_i32_0 : i32, i32, i32, i32
  }
  func.func @transform_1(%arg0: i32, %arg1: i32) -> (i32, i32) {
    %c0_i32 = arith.constant 0 : i32
    %c0_i32_0 = arith.constant 0 : i32
    %c0_i32_1 = arith.constant 0 : i32
    return %c0_i32, %c0_i32_0 : i32, i32
  }
  func.func @transform_2(%arg0: i32, %arg1: i32) -> (i32, i32) {
    %c0_i32 = arith.constant 0 : i32
    %c0_i32_0 = arith.constant 0 : i32
    %c0_i32_1 = arith.constant 0 : i32
    return %c0_i32, %c0_i32_0 : i32, i32
  }
  func.func @transform_3(%arg0: i32, %arg1: i32) -> (i32, i32, i32) {
    %c0_i32 = arith.constant 0 : i32
    %c0_i32_0 = arith.constant 0 : i32
    %c0_i32_1 = arith.constant 0 : i32
    return %arg0, %c0_i32, %c0_i32_0 : i32, i32, i32
  }
}

</mosaic_0001>

<llo_original>
// kernel: basenet_forward.1
$region0: #{basenet_forward.1}
  #allocation0 [shape = 'u32[]', space=smem, size = 0x4, offset = 0x4, fixed_abs, tag = 'smem constant byte address 0x4 - core index']
  #allocation1 [shape = 'u32[144,128]{1,0:T(1,128)}', space=vmem, size = 0x12000, scoped, tag = 'internal scratch']
  #allocation2 [shape = 'f32[1,128]{1,0:T(1,128)}', space=vmem, size = 0x200, scoped, tag = 'scratch operand']
  %s0 = inlined_call_operand.vmem [shape: bf16[2,1,256,36], index: 0, kind: input, shape index: {}]
  %s1 = inlined_call_operand.vmem [shape: bf16[36,128], index: 1, kind: input, shape index: {}]
  %s2 = inlined_call_operand.vmem [shape: f32[1,128], index: 2, kind: input, shape index: {}]
  %s3 = inlined_call_operand.hbm [shape: f32[2,1,128], index: 3, kind: output, shape index: {}]
  %s4 = sld [smem:[#allocation0]]
  $region53: #{basenet_forward.1} parent=0
    _
  %s6 = ssub.s32 1, %s4
  %s7 = scalar_select 0, %s6, %s4
  $region1: #{basenet_forward.1} parent=0
    #allocation3 [shape = 'u8[1024]{0}', space=vmem, size = 0x400, scoped, tag = 'output window, operand 0']
    #allocation4 [shape = 's32[2]{0}', space=sflag, size = 0x8, scoped, tag = 'scoped memory for basenet_forward.1']
    %8 = vsyncpa [#allocation4], 0
    %s9 = scalar_lea.sflag [#allocation4], 1
    %10 = vsyncpa %s9, 0
    loop: start=0, step=1, limit=4
    $region2: #{basenet_forward.1} parent=1 // loop_pre_header
      _
    $region3: #{basenet_forward.1} parent=1 // loop_header
      %s12 = sphi 0, %s16
      %p13 = scmp.ge.s32.totalorder %s12, 4
      %s19 = sphi 0, %s31
      %s20 = sphi 0, %s27
      %s21 = sphi 0, %s19
      %s22 = sphi 0, %s20
      %s23 = sphi 0, %s21
      %s24 = sphi 0, %s22
      %s36 = sphi 0, %s38
      %s39 = sphi 0, %s36
      %s40 = sphi 0, %s39
      %s56 = sphi 0, %s40
      %s60 = sphi 0, %s60
      %s62 = sphi 0, %s60
      %s63 = sphi 0, %s62
      %s77 = sphi 0, %s63
      %s81 = sphi 0, %s81
      %s83 = sphi 0, %s81
      %s84 = sphi 0, %s83
      %s98 = sphi 0, %s84
      %s104 = sphi 0, %s106
      %s107 = sphi 0, %s104
      %s108 = sphi 0, %s107
      %s124 = sphi 0, %s108
    $region4: #{basenet_forward.1} parent=1 // loop_header_branch
      %15 = sbr.rel (%p13) target = $region8
    $region5: #{basenet_forward.1} parent=1 // loop_body
      %s17 = ssub.s32 %s12, 1
      %s18 = ssub.s32 %s12, 2
      %s25 = sadd.s32 1, %s20
      %p26 = scmp.ge.s32.totalorder %s25, 1
      %s27 = scalar_select %p26, 0, %s25
      %s28 = sadd.s32 1, %s19
      %s29 = scalar_select %p26, %s28, %s19
      %p30 = scmp.ge.s32.totalorder %s29, 2
      %s31 = scalar_select %p30, 0, %s29
      %s32 = ssub.s32 %s19, %s31
      %s33 = ssub.s32 %s20, %s27
      %s34 = sor.u32 %s32, %s33
      %p35 = scmp.eq.s32.totalorder %s34, 0
      %s37 = sadd.s32 %s36, 1
      %s38 = scalar_select %p35, %s36, %s37
      %p41 = pneg %p35
      %p42 = scmp.eq.s32.totalorder %s12, 1
      %p43 = por %p41, %p42
      %p44 = scmp.ne.s32.totalorder %s36, %s39
      %p45 = scmp.eq.s32.totalorder %s12, 0
      %p46 = por %p44, %p45
      %p47 = scmp.ne.s32.totalorder %s36, %s39
      %p48 = scmp.eq.s32.totalorder %s17, 1
      %p49 = por %p47, %p48
      %p50 = scmp.ne.s32.totalorder %s39, %s40
      %p51 = scmp.eq.s32.totalorder %s17, 0
      %p52 = por %p50, %p51
      %p53 = scmp.ne.s32.totalorder %s39, %s40
      %p54 = scmp.eq.s32.totalorder %s18, 1
      %p55 = por %p53, %p54
      %p57 = scmp.ne.s32.totalorder %s40, %s56
      %p58 = scmp.eq.s32.totalorder %s18, 0
      %p59 = por %p57, %p58
      %s61 = sadd.s32 %s60, 1
      %p64 = scmp.eq.s32.totalorder %s12, 1
      %p65 = scmp.ne.s32.totalorder %s60, %s62
      %p66 = scmp.eq.s32.totalorder %s12, 0
      %p67 = por %p65, %p66
      %p68 = scmp.ne.s32.totalorder %s60, %s62
      %p69 = scmp.eq.s32.totalorder %s17, 1
      %p70 = por %p68, %p69
      %p71 = scmp.ne.s32.totalorder %s62, %s63
      %p72 = scmp.eq.s32.totalorder %s17, 0
      %p73 = por %p71, %p72
      %p74 = scmp.ne.s32.totalorder %s62, %s63
      %p75 = scmp.eq.s32.totalorder %s18, 1
      %p76 = por %p74, %p75
      %p78 = scmp.ne.s32.totalorder %s63, %s77
      %p79 = scmp.eq.s32.totalorder %s18, 0
      %p80 = por %p78, %p79
      %s82 = sadd.s32 %s81, 1
      %p85 = scmp.eq.s32.totalorder %s12, 1
      %p86 = scmp.ne.s32.totalorder %s81, %s83
      %p87 = scmp.eq.s32.totalorder %s12, 0
      %p88 = por %p86, %p87
      %p89 = scmp.ne.s32.totalorder %s81, %s83
      %p90 = scmp.eq.s32.totalorder %s17, 1
      %p91 = por %p89, %p90
      %p92 = scmp.ne.s32.totalorder %s83, %s84
      %p93 = scmp.eq.s32.totalorder %s17, 0
      %p94 = por %p92, %p93
      %p95 = scmp.ne.s32.totalorder %s83, %s84
      %p96 = scmp.eq.s32.totalorder %s18, 1
      %p97 = por %p95, %p96
      %p99 = scmp.ne.s32.totalorder %s84, %s98
      %p100 = scmp.eq.s32.totalorder %s18, 0
      %p101 = por %p99, %p100
      %s102 = ssub.s32 %s19, %s31
      %p103 = scmp.eq.s32.totalorder %s102, 0
      %s105 = sadd.s32 %s104, 1
      %s106 = scalar_select %p103, %s104, %s105
      %p109 = pneg %p103
      %p110 = scmp.eq.s32.totalorder %s12, 1
      %p111 = por %p109, %p110
      %p112 = scmp.ne.s32.totalorder %s104, %s107
      %p113 = scmp.eq.s32.totalorder %s12, 0
      %p114 = por %p112, %p113
      %p115 = scmp.ne.s32.totalorder %s104, %s107
      %p116 = scmp.eq.s32.totalorder %s17, 1
      %p117 = por %p115, %p116
      %p118 = scmp.ne.s32.totalorder %s107, %s108
      %p119 = scmp.eq.s32.totalorder %s17, 0
      %p120 = por %p118, %p119
      %p121 = scmp.ne.s32.totalorder %s107, %s108
      %p122 = scmp.eq.s32.totalorder %s18, 1
      %p123 = por %p121, %p122
      %p125 = scmp.ne.s32.totalorder %s108, %s124
      %p126 = scmp.eq.s32.totalorder %s18, 0
      %p127 = por %p125, %p126
      %p128 = scmp.le.s32.totalorder 1, %s12
      %p129 = scmp.lt.s32.totalorder %s12, 3
      %p130 = pnand %p128, %p129
      %p131 = pneg %p130
      // Predicated region
      $region9: #{basenet_forward.1} parent=5 // pred_check
        _
      $region10: #{basenet_forward.1} parent=5 // pred_check_branch
        %133 = sbr.rel (%p130) target = $region12
      $region11: #{basenet_forward.1} parent=5 // pred_region
        %s134 = ssub.s32 %s12, 1
        // Predicated region
        $region13: #{basenet_forward.1} parent=11 // pred_check
          %p135 = pneg %p73
        $region14: #{basenet_forward.1} parent=11 // pred_check_branch
          %137 = sbr.rel (%p135) target = $region16
        $region15: #{basenet_forward.1} parent=11 // pred_region
          _
        $region16: #{basenet_forward.1} parent=11 // pred_fallthru
          _
        // Predicated region
        $region17: #{basenet_forward.1} parent=11 // pred_check
          %p138 = pneg %p94
        $region18: #{basenet_forward.1} parent=11 // pred_check_branch
          %140 = sbr.rel (%p138) target = $region20
        $region19: #{basenet_forward.1} parent=11 // pred_region
          _
        $region20: #{basenet_forward.1} parent=11 // pred_fallthru
          _
      $region12: #{basenet_forward.1} parent=5 // pred_fallthru
        _
      %p141 = scmp.lt.s32.totalorder %s12, 2
      // Predicated region
      $region21: #{basenet_forward.1} parent=5 // pred_check
        %p142 = pneg %p141
      $region22: #{basenet_forward.1} parent=5 // pred_check_branch
        %144 = sbr.rel (%p142) target = $region24
      $region23: #{basenet_forward.1} parent=5 // pred_region
        // Predicated region
        $region25: #{basenet_forward.1} parent=23 // pred_check
          %p145 = pneg %p46
        $region26: #{basenet_forward.1} parent=23 // pred_check_branch
          %147 = sbr.rel (%p145) target = $region28
        $region27: #{basenet_forward.1} parent=23 // pred_region
          %s148 = smul.u32 32, %s20
          %p149 = scmp.lt.s32.totalorder %s19, 1
          %s150 = scalar_select %p149, %s19, 1
          %p151 = scmp.lt.s32.totalorder %s148, 31
          %s152 = scalar_select %p151, %s148, 31
          %s153 = smul.addr %s150, 32
          %s154 = sadd.s32 %s152, %s153
          %s155 = smul.addr %s154, 4
          %s156 = scalar_lea.vmem %s0, %s155
          %s157 = smul.u32 32, %s20
        $region28: #{basenet_forward.1} parent=23 // pred_fallthru
          _
      $region24: #{basenet_forward.1} parent=5 // pred_fallthru
        _
      %p158 = scmp.le.s32.totalorder 1, %s12
      %p159 = scmp.lt.s32.totalorder %s12, 3
      %p160 = pnand %p158, %p159
      %p161 = pneg %p160
      // Predicated region
      $region29: #{basenet_forward.1} parent=5 // pred_check
        _
      $region30: #{basenet_forward.1} parent=5 // pred_check_branch
        %163 = sbr.rel (%p160) target = $region32
      $region31: #{basenet_forward.1} parent=5 // pred_region
        %s164 = ssub.s32 %s12, 1
        %s165 = smul.u32 32, %s22
        %p166 = scmp.lt.s32.totalorder %s21, 1
        %s167 = scalar_select %p166, %s21, 1
        %p168 = scmp.lt.s32.totalorder %s165, 31
        %s169 = scalar_select %p168, %s165, 31
        %s170 = smul.addr %s167, 32
        %s171 = sadd.s32 %s169, %s170
        %s172 = smul.addr %s171, 4
        %s173 = scalar_lea.vmem %s0, %s172
        %p174 = pneg %p52
        %p175 = pneg %p49
        %p176 = pneg %p73
        %p177 = pneg %p70
        %p178 = pneg %p94
        %p179 = pneg %p91
        %p180 = pneg %p120
        %p181 = pneg %p117
        %s182 = sand.u32 %s107, 1
        %s183 = scalar_lea.sflag [#allocation4], %s182
        %s184 = sand.u32 %s107, 1
        %s185 = scalar_lea.vmem [#allocation3], %s184
        %s186 = smul.u32 32, %s22
        %p187 = scmp.lt.s32.totalorder %s21, 1
        %s188 = scalar_select %p187, %s21, 1
        %p189 = scmp.lt.s32.totalorder %s186, 31
        %s190 = scalar_select %p189, %s186, 31
        %s191 = smul.addr %s188, 32
        %s192 = sadd.s32 %s190, %s191
        %s193 = smul.addr %s192, 4
        %s194 = scalar_lea.vmem %s0, %s193
        %s195 = smul.u32 32, %s22
        %p197 = scmp.eq.s32.totalorder %s22, 0
        // Predicated region
        $region33: #{basenet_forward.1} parent=31 // pred_check
          %p198 = pneg %p197
        $region34: #{basenet_forward.1} parent=31 // pred_check_branch
          %200 = sbr.rel (%p198) target = $region36
        $region35: #{basenet_forward.1} parent=31 // pred_region
          %201 = vst [vmem:[#allocation2] sm:$0x1] 0.0
        $region36: #{basenet_forward.1} parent=31 // pred_fallthru
          _
        %v202 = vld [vmem:[%s1] sm:$0xf]
        %v203 = vld [vmem:[%s1 + $0x4] sm:$0xf]
        %v204 = vld [vmem:[%s1 + $0x8] sm:$0xf]
        %v205 = vld [vmem:[%s1 + $0xc] sm:$0xf]
        %v206 = vld [vmem:[%s1 + $0x10] sm:$0x3]
        %v207 = vld [vmem:[%s2] sm:$0x1]
        %v208 = vld [vmem:[%s194] sm:$0xf]
        %v209 = vld [vmem:[%s194 + $0x4] sm:$0xf]
        %v210 = vld [vmem:[%s194 + $0x8] sm:$0xf]
        %v211 = vld [vmem:[%s194 + $0xc] sm:$0xf]
        %v212 = vld [vmem:[%s194 + $0x10] sm:$0xf]
        %v213 = vld [vmem:[%s194 + $0x14] sm:$0xf]
        %v214 = vld [vmem:[%s194 + $0x18] sm:$0xf]
        %v215 = vld [vmem:[%s194 + $0x1c] sm:$0xf]
        %v216 = vld [vmem:[%s194 + $0x20] sm:$0xf]
        %v217 = vld [vmem:[%s194 + $0x24] sm:$0xf]
        %v218 = vld [vmem:[%s194 + $0x28] sm:$0xf]
        %v219 = vld [vmem:[%s194 + $0x2c] sm:$0xf]
        %v220 = vld [vmem:[%s194 + $0x30] sm:$0xf]
        %v221 = vld [vmem:[%s194 + $0x34] sm:$0xf]
        %v222 = vld [vmem:[%s194 + $0x38] sm:$0xf]
        %v223 = vld [vmem:[%s194 + $0x3c] sm:$0xf]
        %v224 = vld [vmem:[%s194 + $0x40] sm:$0xf]
        %v225 = vld [vmem:[%s194 + $0x44] sm:$0xf]
        %v226 = vld [vmem:[%s194 + $0x48] sm:$0xf]
        %v227 = vld [vmem:[%s194 + $0x4c] sm:$0xf]
        %v228 = vld [vmem:[%s194 + $0x50] sm:$0xf]
        %v229 = vld [vmem:[%s194 + $0x54] sm:$0xf]
        %v230 = vld [vmem:[%s194 + $0x58] sm:$0xf]
        %v231 = vld [vmem:[%s194 + $0x5c] sm:$0xf]
        %v232 = vld [vmem:[%s194 + $0x60] sm:$0xf]
        %v233 = vld [vmem:[%s194 + $0x64] sm:$0xf]
        %v234 = vld [vmem:[%s194 + $0x68] sm:$0xf]
        %v235 = vld [vmem:[%s194 + $0x6c] sm:$0xf]
        %v236 = vld [vmem:[%s194 + $0x70] sm:$0xf]
        %v237 = vld [vmem:[%s194 + $0x74] sm:$0xf]
        %v238 = vld [vmem:[%s194 + $0x78] sm:$0xf]
        %v239 = vld [vmem:[%s194 + $0x7c] sm:$0xf]
        %v241 = vlaneseq
        %v242 = vshrl.u32 %v241, 7
        %v243 = vsub.s32 0, %v242
        %v244 = vrot.slane %v207, %v243
        %v278 = vunpack.c.l.b16 %v208
        %v279 = vunpack.c.l.b16 %v209
        %v280 = vunpack.c.l.b16 %v210
        %v281 = vunpack.c.l.b16 %v211
        %v282 = vunpack.c.l.b16 %v212
        %v283 = vunpack.c.l.b16 %v213
        %v284 = vunpack.c.l.b16 %v214
        %v285 = vunpack.c.l.b16 %v215
        %v286 = vunpack.c.l.b16 %v216
        %v287 = vunpack.c.l.b16 %v217
        %v288 = vunpack.c.l.b16 %v218
        %v289 = vunpack.c.l.b16 %v219
        %v290 = vunpack.c.l.b16 %v220
        %v291 = vunpack.c.l.b16 %v221
        %v292 = vunpack.c.l.b16 %v222
        %v293 = vunpack.c.l.b16 %v223
        %v294 = vunpack.c.l.b16 %v224
        %v295 = vunpack.c.l.b16 %v225
        %v296 = vunpack.c.l.b16 %v226
        %v297 = vunpack.c.l.b16 %v227
        %v298 = vunpack.c.l.b16 %v228
        %v299 = vunpack.c.l.b16 %v229
        %v300 = vunpack.c.l.b16 %v230
        %v301 = vunpack.c.l.b16 %v231
        %v302 = vunpack.c.l.b16 %v232
        %v303 = vunpack.c.l.b16 %v233
        %v304 = vunpack.c.l.b16 %v234
        %v305 = vunpack.c.l.b16 %v235
        %v306 = vunpack.c.l.b16 %v236
        %v307 = vunpack.c.l.b16 %v237
        %v308 = vunpack.c.l.b16 %v238
        %v309 = vunpack.c.l.b16 %v239
        %v310 = vpack.c.b16 %v279, %v278
        %v311 = vpack.c.b16 %v281, %v280
        %v312 = vpack.c.b16 %v283, %v282
        %v313 = vpack.c.b16 %v285, %v284
        %v314 = vpack.c.b16 %v287, %v286
        %v315 = vpack.c.b16 %v289, %v288
        %v316 = vpack.c.b16 %v291, %v290
        %v317 = vpack.c.b16 %v293, %v292
        %v318 = vpack.c.b16 %v295, %v294
        %v319 = vpack.c.b16 %v297, %v296
        %v320 = vpack.c.b16 %v299, %v298
        %v321 = vpack.c.b16 %v301, %v300
        %v322 = vpack.c.b16 %v303, %v302
        %v323 = vpack.c.b16 %v305, %v304
        %v324 = vpack.c.b16 %v307, %v306
        %v325 = vpack.c.b16 %v309, %v308
        %v331 = vunpack.c.l.b16 %v202
        %v332 = vunpack.c.l.b16 %v203
        %v333 = vunpack.c.l.b16 %v204
        %v334 = vunpack.c.l.b16 %v205
        %v335 = vunpack.c.l.b16 %v206
        %v336 = vpack.c.b16 %v332, %v331
        %v337 = vpack.c.b16 %v334, %v333
        %v338 = vpack.c.b16 %v335, %v335
        %vm341 = vcmask 293888
        %v343 = vsel %vm341, %v310, 0
        %v346 = vsel %vm341, %v311, 0
        %v349 = vsel %vm341, %v312, 0
        %v352 = vsel %vm341, %v313, 0
        %v355 = vsel %vm341, %v314, 0
        %v358 = vsel %vm341, %v315, 0
        %v361 = vsel %vm341, %v316, 0
        %v364 = vsel %vm341, %v317, 0
        %v367 = vsel %vm341, %v318, 0
        %v370 = vsel %vm341, %v319, 0
        %v373 = vsel %vm341, %v320, 0
        %v376 = vsel %vm341, %v321, 0
        %v379 = vsel %vm341, %v322, 0
        %v382 = vsel %vm341, %v323, 0
        %v385 = vsel %vm341, %v324, 0
        %v388 = vsel %vm341, %v325, 0
        %vm390 = vcmask 1041408
        %v392 = vsel %vm390, %v338, 0
        %394 = vmatprep.subr.bf16.mxu0 0
        %395 = vmatpush1.bf16.msra.mxu0 0
        %396 = vmatprep.subr.bf16.mxu0 0
        %397 = vmatpush1.bf16.msra.mxu0 0
        %398 = vmatprep.subr.bf16.mxu0 0
        %399 = vmatpush1.bf16.msra.mxu0 0
        %400 = vmatprep.subr.bf16.mxu0 0
        %401 = vmatpush1.bf16.msra.mxu0 0
        %402 = vmatprep.subr.bf16.mxu0 0
        %403 = vmatpush1.bf16.msra.mxu0 0
        %404 = vmatprep.subr.bf16.mxu0 0
        %405 = vmatpush1.bf16.msra.mxu0 %v392
        %406 = vmatprep.subr.bf16.mxu0 0
        %407 = vmatpush1.bf16.msra.mxu0 %v337
        %408 = vmatprep.subr.bf16.mxu0 0
        %409 = vmatpush1.bf16.msra.mxu0 %v336
        %410 = vmatprep.subr.bf16.mxu0 0
        %411 = vmatpush2.bf16.msra.mxu0 0
        %412 = vmatprep.subr.bf16.mxu0 0
        %413 = vmatpush2.bf16.msra.mxu0 0
        %414 = vmatprep.subr.bf16.mxu0 0
        %415 = vmatpush2.bf16.msra.mxu0 0
        %416 = vmatprep.subr.bf16.mxu0 0
        %417 = vmatpush2.bf16.msra.mxu0 0
        %418 = vmatprep.subr.bf16.mxu0 0
        %419 = vmatpush2.bf16.msra.mxu0 0
        %420 = vmatprep.subr.bf16.mxu0 0
        %421 = vmatpush2.bf16.msra.mxu0 0
        %422 = vmatprep.subr.bf16.mxu0 0
        %423 = vmatpush2.bf16.msra.mxu0 0
        %424 = vmatprep.subr.bf16.mxu0 0
        %425 = vmatpush2.bf16.msra.mxu0 0
        %426 = vmatprep.mubr.bf16.mxu0 0
        %427 = vmatmul.mubr.bf16.gmra.mxu0 %v343
        %v428 = vpop.f32.mrf.mxu0
        %v429 = vadd.f32 %v244, %v428
        %v430 = vpop.f32.mrf.mxu0
        %v431 = vpop.f32.mrf.mxu0
        %v432 = vadd.f32 %v244, %v431
        %v433 = vpop.f32.mrf.mxu0
        %434 = vmatprep.mubr.bf16.mxu0 0
        %435 = vmatmul.mubr.bf16.gmra.mxu0 %v346
        %v436 = vpop.f32.mrf.mxu0
        %v437 = vadd.f32 %v244, %v436
        %v438 = vpop.f32.mrf.mxu0
        %v439 = vpop.f32.mrf.mxu0
        %v440 = vadd.f32 %v244, %v439
        %v441 = vpop.f32.mrf.mxu0
        %442 = vmatprep.mubr.bf16.mxu0 0
        %443 = vmatmul.mubr.bf16.gmra.mxu0 %v349
        %v444 = vpop.f32.mrf.mxu0
        %v445 = vadd.f32 %v244, %v444
        %v446 = vpop.f32.mrf.mxu0
        %v447 = vpop.f32.mrf.mxu0
        %v448 = vadd.f32 %v244, %v447
        %v449 = vpop.f32.mrf.mxu0
        %450 = vmatprep.mubr.bf16.mxu0 0
        %451 = vmatmul.mubr.bf16.gmra.mxu0 %v352
        %v452 = vpop.f32.mrf.mxu0
        %v453 = vadd.f32 %v244, %v452
        %v454 = vpop.f32.mrf.mxu0
        %v455 = vpop.f32.mrf.mxu0
        %v456 = vadd.f32 %v244, %v455
        %v457 = vpop.f32.mrf.mxu0
        %458 = vmatprep.mubr.bf16.mxu0 0
        %459 = vmatmul.mubr.bf16.gmra.mxu0 %v355
        %v460 = vpop.f32.mrf.mxu0
        %v461 = vadd.f32 %v244, %v460
        %v462 = vpop.f32.mrf.mxu0
        %v463 = vpop.f32.mrf.mxu0
        %v464 = vadd.f32 %v244, %v463
        %v465 = vpop.f32.mrf.mxu0
        %466 = vmatprep.mubr.bf16.mxu0 0
        %467 = vmatmul.mubr.bf16.gmra.mxu0 %v358
        %v468 = vpop.f32.mrf.mxu0
        %v469 = vadd.f32 %v244, %v468
        %v470 = vpop.f32.mrf.mxu0
        %v471 = vpop.f32.mrf.mxu0
        %v472 = vadd.f32 %v244, %v471
        %v473 = vpop.f32.mrf.mxu0
        %474 = vmatprep.mubr.bf16.mxu0 0
        %475 = vmatmul.mubr.bf16.gmra.mxu0 %v361
        %v476 = vpop.f32.mrf.mxu0
        %v477 = vadd.f32 %v244, %v476
        %v478 = vpop.f32.mrf.mxu0
        %v479 = vpop.f32.mrf.mxu0
        %v480 = vadd.f32 %v244, %v479
        %v481 = vpop.f32.mrf.mxu0
        %482 = vmatprep.mubr.bf16.mxu0 0
        %483 = vmatmul.mubr.bf16.gmra.mxu0 %v364
        %v484 = vpop.f32.mrf.mxu0
        %v485 = vadd.f32 %v244, %v484
        %v486 = vpop.f32.mrf.mxu0
        %v487 = vpop.f32.mrf.mxu0
        %v488 = vadd.f32 %v244, %v487
        %v489 = vpop.f32.mrf.mxu0
        %490 = vmatprep.mubr.bf16.mxu0 0
        %491 = vmatmul.mubr.bf16.gmra.mxu0 %v367
        %v492 = vpop.f32.mrf.mxu0
        %v493 = vadd.f32 %v244, %v492
        %v494 = vpop.f32.mrf.mxu0
        %v495 = vpop.f32.mrf.mxu0
        %v496 = vadd.f32 %v244, %v495
        %v497 = vpop.f32.mrf.mxu0
        %498 = vmatprep.mubr.bf16.mxu0 0
        %499 = vmatmul.mubr.bf16.gmra.mxu0 %v370
        %v500 = vpop.f32.mrf.mxu0
        %v501 = vadd.f32 %v244, %v500
        %v502 = vpop.f32.mrf.mxu0
        %v503 = vpop.f32.mrf.mxu0
        %v504 = vadd.f32 %v244, %v503
        %v505 = vpop.f32.mrf.mxu0
        %506 = vmatprep.mubr.bf16.mxu0 0
        %507 = vmatmul.mubr.bf16.gmra.mxu0 %v373
        %v508 = vpop.f32.mrf.mxu0
        %v509 = vadd.f32 %v244, %v508
        %v510 = vpop.f32.mrf.mxu0
        %v511 = vpop.f32.mrf.mxu0
        %v512 = vadd.f32 %v244, %v511
        %v513 = vpop.f32.mrf.mxu0
        %514 = vmatprep.mubr.bf16.mxu0 0
        %515 = vmatmul.mubr.bf16.gmra.mxu0 %v376
        %v516 = vpop.f32.mrf.mxu0
        %v517 = vadd.f32 %v244, %v516
        %v518 = vpop.f32.mrf.mxu0
        %v519 = vpop.f32.mrf.mxu0
        %v520 = vadd.f32 %v244, %v519
        %v521 = vpop.f32.mrf.mxu0
        %522 = vmatprep.mubr.bf16.mxu0 0
        %523 = vmatmul.mubr.bf16.gmra.mxu0 %v379
        %v524 = vpop.f32.mrf.mxu0
        %v525 = vadd.f32 %v244, %v524
        %v526 = vpop.f32.mrf.mxu0
        %v527 = vpop.f32.mrf.mxu0
        %v528 = vadd.f32 %v244, %v527
        %v529 = vpop.f32.mrf.mxu0
        %530 = vmatprep.mubr.bf16.mxu0 0
        %531 = vmatmul.mubr.bf16.gmra.mxu0 %v382
        %v532 = vpop.f32.mrf.mxu0
        %v533 = vadd.f32 %v244, %v532
        %v534 = vpop.f32.mrf.mxu0
        %v535 = vpop.f32.mrf.mxu0
        %v536 = vadd.f32 %v244, %v535
        %v537 = vpop.f32.mrf.mxu0
        %538 = vmatprep.mubr.bf16.mxu0 0
        %539 = vmatmul.mubr.bf16.gmra.mxu0 %v385
        %v540 = vpop.f32.mrf.mxu0
        %v541 = vadd.f32 %v244, %v540
        %v542 = vpop.f32.mrf.mxu0
        %v543 = vpop.f32.mrf.mxu0
        %v544 = vadd.f32 %v244, %v543
        %v545 = vpop.f32.mrf.mxu0
        %546 = vmatprep.mubr.bf16.mxu0 0
        %547 = vmatmul.mubr.bf16.gmra.mxu0 %v388
        %v548 = vpop.f32.mrf.mxu0
        %v549 = vadd.f32 %v244, %v548
        %v550 = vpop.f32.mrf.mxu0
        %v551 = vpop.f32.mrf.mxu0
        %v552 = vadd.f32 %v244, %v551
        %v553 = vpop.f32.mrf.mxu0
        %554 = vdwg.mxu0
        %v555 = vmax.f32 %v429, 0.0
        %v556 = vmax.f32 %v432, 0.0
        %v557 = vmax.f32 %v437, 0.0
        %v558 = vmax.f32 %v440, 0.0
        %v559 = vmax.f32 %v445, 0.0
        %v560 = vmax.f32 %v448, 0.0
        %v561 = vmax.f32 %v453, 0.0
        %v562 = vmax.f32 %v456, 0.0
        %v563 = vmax.f32 %v461, 0.0
        %v564 = vmax.f32 %v464, 0.0
        %v565 = vmax.f32 %v469, 0.0
        %v566 = vmax.f32 %v472, 0.0
        %v567 = vmax.f32 %v477, 0.0
        %v568 = vmax.f32 %v480, 0.0
        %v569 = vmax.f32 %v485, 0.0
        %v570 = vmax.f32 %v488, 0.0
        %v571 = vmax.f32 %v493, 0.0
        %v572 = vmax.f32 %v496, 0.0
        %v573 = vmax.f32 %v501, 0.0
        %v574 = vmax.f32 %v504, 0.0
        %v575 = vmax.f32 %v509, 0.0
        %v576 = vmax.f32 %v512, 0.0
        %v577 = vmax.f32 %v517, 0.0
        %v578 = vmax.f32 %v520, 0.0
        %v579 = vmax.f32 %v525, 0.0
        %v580 = vmax.f32 %v528, 0.0
        %v581 = vmax.f32 %v533, 0.0
        %v582 = vmax.f32 %v536, 0.0
        %v583 = vmax.f32 %v541, 0.0
        %v584 = vmax.f32 %v544, 0.0
        %v585 = vmax.f32 %v549, 0.0
        %v586 = vmax.f32 %v552, 0.0
        %v587 = vmax.f32 %v555, 1e-06
        %v588 = vmax.f32 %v556, 1e-06
        %v589 = vmax.f32 %v557, 1e-06
        %v590 = vmax.f32 %v558, 1e-06
        %v591 = vmax.f32 %v559, 1e-06
        %v592 = vmax.f32 %v560, 1e-06
        %v593 = vmax.f32 %v561, 1e-06
        %v594 = vmax.f32 %v562, 1e-06
        %v595 = vmax.f32 %v563, 1e-06
        %v596 = vmax.f32 %v564, 1e-06
        %v597 = vmax.f32 %v565, 1e-06
        %v598 = vmax.f32 %v566, 1e-06
        %v599 = vmax.f32 %v567, 1e-06
        %v600 = vmax.f32 %v568, 1e-06
        %v601 = vmax.f32 %v569, 1e-06
        %v602 = vmax.f32 %v570, 1e-06
        %v603 = vmax.f32 %v571, 1e-06
        %v604 = vmax.f32 %v572, 1e-06
        %v605 = vmax.f32 %v573, 1e-06
        %v606 = vmax.f32 %v574, 1e-06
        %v607 = vmax.f32 %v575, 1e-06
        %v608 = vmax.f32 %v576, 1e-06
        %v609 = vmax.f32 %v577, 1e-06
        %v610 = vmax.f32 %v578, 1e-06
        %v611 = vmax.f32 %v579, 1e-06
        %v612 = vmax.f32 %v580, 1e-06
        %v613 = vmax.f32 %v581, 1e-06
        %v614 = vmax.f32 %v582, 1e-06
        %v615 = vmax.f32 %v583, 1e-06
        %v616 = vmax.f32 %v584, 1e-06
        %v617 = vmax.f32 %v585, 1e-06
        %v618 = vmax.f32 %v586, 1e-06
        %v619 = vmul.f32 %v587, %v587
        %v620 = vmul.f32 %v588, %v588
        %v621 = vmul.f32 %v589, %v589
        %v622 = vmul.f32 %v590, %v590
        %v623 = vmul.f32 %v591, %v591
        %v624 = vmul.f32 %v592, %v592
        %v625 = vmul.f32 %v593, %v593
        %v626 = vmul.f32 %v594, %v594
        %v627 = vmul.f32 %v595, %v595
        %v628 = vmul.f32 %v596, %v596
        %v629 = vmul.f32 %v597, %v597
        %v630 = vmul.f32 %v598, %v598
        %v631 = vmul.f32 %v599, %v599
        %v632 = vmul.f32 %v600, %v600
        %v633 = vmul.f32 %v601, %v601
        %v634 = vmul.f32 %v602, %v602
        %v635 = vmul.f32 %v603, %v603
        %v636 = vmul.f32 %v604, %v604
        %v637 = vmul.f32 %v605, %v605
        %v638 = vmul.f32 %v606, %v606
        %v639 = vmul.f32 %v607, %v607
        %v640 = vmul.f32 %v608, %v608
        %v641 = vmul.f32 %v609, %v609
        %v642 = vmul.f32 %v610, %v610
        %v643 = vmul.f32 %v611, %v611
        %v644 = vmul.f32 %v612, %v612
        %v645 = vmul.f32 %v613, %v613
        %v646 = vmul.f32 %v614, %v614
        %v647 = vmul.f32 %v615, %v615
        %v648 = vmul.f32 %v616, %v616
        %v649 = vmul.f32 %v617, %v617
        %v650 = vmul.f32 %v618, %v618
        %v651 = vmul.f32 %v619, %v587
        %v652 = vmul.f32 %v620, %v588
        %v653 = vmul.f32 %v621, %v589
        %v654 = vmul.f32 %v622, %v590
        %v655 = vmul.f32 %v623, %v591
        %v656 = vmul.f32 %v624, %v592
        %v657 = vmul.f32 %v625, %v593
        %v658 = vmul.f32 %v626, %v594
        %v659 = vmul.f32 %v627, %v595
        %v660 = vmul.f32 %v628, %v596
        %v661 = vmul.f32 %v629, %v597
        %v662 = vmul.f32 %v630, %v598
        %v663 = vmul.f32 %v631, %v599
        %v664 = vmul.f32 %v632, %v600
        %v665 = vmul.f32 %v633, %v601
        %v666 = vmul.f32 %v634, %v602
        %v667 = vmul.f32 %v635, %v603
        %v668 = vmul.f32 %v636, %v604
        %v669 = vmul.f32 %v637, %v605
        %v670 = vmul.f32 %v638, %v606
        %v671 = vmul.f32 %v639, %v607
        %v672 = vmul.f32 %v640, %v608
        %v673 = vmul.f32 %v641, %v609
        %v674 = vmul.f32 %v642, %v610
        %v675 = vmul.f32 %v643, %v611
        %v676 = vmul.f32 %v644, %v612
        %v677 = vmul.f32 %v645, %v613
        %v678 = vmul.f32 %v646, %v614
        %v679 = vmul.f32 %v647, %v615
        %v680 = vmul.f32 %v648, %v616
        %v681 = vmul.f32 %v649, %v617
        %v682 = vmul.f32 %v650, %v618
        %v683 = vadd.f32 %v651, %v652
        %v684 = vadd.f32 %v683, %v653
        %v685 = vadd.f32 %v684, %v654
        %v686 = vadd.f32 %v685, %v655
        %v687 = vadd.f32 %v686, %v656
        %v688 = vadd.f32 %v687, %v657
        %v689 = vadd.f32 %v688, %v658
        %v690 = vadd.f32 %v689, %v659
        %v691 = vadd.f32 %v690, %v660
        %v692 = vadd.f32 %v691, %v661
        %v693 = vadd.f32 %v692, %v662
        %v694 = vadd.f32 %v693, %v663
        %v695 = vadd.f32 %v694, %v664
        %v696 = vadd.f32 %v695, %v665
        %v697 = vadd.f32 %v696, %v666
        %v698 = vadd.f32 %v697, %v667
        %v699 = vadd.f32 %v698, %v668
        %v700 = vadd.f32 %v699, %v669
        %v701 = vadd.f32 %v700, %v670
        %v702 = vadd.f32 %v701, %v671
        %v703 = vadd.f32 %v702, %v672
        %v704 = vadd.f32 %v703, %v673
        %v705 = vadd.f32 %v704, %v674
        %v706 = vadd.f32 %v705, %v675
        %v707 = vadd.f32 %v706, %v676
        %v708 = vadd.f32 %v707, %v677
        %v709 = vadd.f32 %v708, %v678
        %v710 = vadd.f32 %v709, %v679
        %v711 = vadd.f32 %v710, %v680
        %v712 = vadd.f32 %v711, %v681
        %v713 = vadd.f32 %v712, %v682
        %v714 = vrot.slane %v713, 4
        %v715 = vadd.f32 %v713, %v714
        %v716 = vrot.slane %v715, 2
        %v717 = vadd.f32 %v715, %v716
        %v718 = vrot.slane %v717, 1
        %v719 = vadd.f32 %v717, %v718
        %v720 = vadd.f32 %v719, 0.0
        %v721 = vld [vmem:[#allocation2] sm:$0x1]
        %v722 = vadd.f32 %v721, %v720
        %723 = vst [vmem:[#allocation2] sm:$0x1] %v722
        // Predicated region
        $region37: #{basenet_forward.1} parent=31 // pred_check
          %p724 = pneg %p197
        $region38: #{basenet_forward.1} parent=31 // pred_check_branch
          %726 = sbr.rel (%p724) target = $region40
        $region39: #{basenet_forward.1} parent=31 // pred_region
          %v727 = vld [vmem:[#allocation2] sm:$0x1]
          %v728 = vmul.f32 %v727, 0.00390625
          %v729 = vpow.f32 %v728, 0.33333334
          %v730 = vlaneseq
          %v731 = vand.u32 %v730, 127
          %vm732 = vcmp.lt.s32.totalorder %v731, 32
          %v733 = vsel %vm732, %v729, 0.0
          %v734 = vmul.f32 %v733, %v733
          %vm735 = vcmask 1040384
          %v736 = vsel %vm735, %v734, 0.0
          %737 = vadd.xlane.f32.xlu0 %v736
          %v738 = vpop.xlane.xlu0 %737
          %v739 = vrsqrt.pop %v738
          %v740 = vmul.f32 %v738, %v739
          %vm741 = vcmp.eq.f32.partialorder %v738, inf
          %v742 = vsel %vm741, %v738, %v740
          %vm743 = vcmp.eq.f32.partialorder %v738, 0.0
          %v744 = vand.u32 %v738, 2147483648
          %v745 = vsel %vm743, %v744, %v742
          %v746 = vmax.f32 %v745, 1e-12
          %v747 = vrcp.pop %v746
          %v748 = vmul.f32 %v733, %v747
          %749 = vst [vmem:[%s185] sm:$0x1] %v748
        $region40: #{basenet_forward.1} parent=31 // pred_fallthru
          _
        %s750 = sand.u32 %s107, 1
        %s751 = scalar_lea.sflag [#allocation4], %s750
        %s752 = sand.u32 %s107, 1
        %s753 = scalar_lea.vmem [#allocation3], %s752
        // Predicated region
        $region41: #{basenet_forward.1} parent=31 // pred_check
          %p754 = pneg %p117
        $region42: #{basenet_forward.1} parent=31 // pred_check_branch
          %756 = sbr.rel (%p754) target = $region44
        $region43: #{basenet_forward.1} parent=31 // pred_region
          %s758 = ssub.s32 16, 16
          %759 = vsyncadd %s751, %s758
          %s760 = smul.addr %s21, 16
          %s761 = scalar_lea.hbm %s3, %s760
          %s763 = sshll.u32 %s753, 4
          %s764 = int_to_ptr.vmem [resolvable:$true] %s763
          %766 = dma.vmem_to_hbm [thread:$0]  %s764, 16, %s761, %s751
        $region44: #{basenet_forward.1} parent=31 // pred_fallthru
          _
      $region32: #{basenet_forward.1} parent=5 // pred_fallthru
        _
      %p767 = scmp.le.s32.totalorder 2, %s12
      // Predicated region
      $region45: #{basenet_forward.1} parent=5 // pred_check
        %p768 = pneg %p767
      $region46: #{basenet_forward.1} parent=5 // pred_check_branch
        %770 = sbr.rel (%p768) target = $region48
      $region47: #{basenet_forward.1} parent=5 // pred_region
        %s771 = ssub.s32 %s12, 2
        // Predicated region
        $region49: #{basenet_forward.1} parent=47 // pred_check
          %p772 = pneg %p123
        $region50: #{basenet_forward.1} parent=47 // pred_check_branch
          %774 = sbr.rel (%p772) target = $region52
        $region51: #{basenet_forward.1} parent=47 // pred_region
          %s775 = sand.u32 %s108, 1
          %s776 = scalar_lea.sflag [#allocation4], %s775
          %s777 = sand.u32 %s108, 1
          %s778 = scalar_lea.vmem [#allocation3], %s777
          %779 = dma.done %s776, 16
        $region52: #{basenet_forward.1} parent=47 // pred_fallthru
          _
      $region48: #{basenet_forward.1} parent=5 // pred_fallthru
        _
    $region6: #{basenet_forward.1} parent=1 // loop_footer
      %s16 = sadd.s32 1, %s12
    $region7: #{basenet_forward.1} parent=1 // loop_footer_branch
      %11 = sbr.rel target = $region3
    $region8: #{basenet_forward.1} parent=1 // loop_exit
      _
    %780 = vsyncpa [#allocation4], 1
    %s781 = scalar_lea.sflag [#allocation4], 1
    %782 = vsyncpa %s781, 1

</llo_original>
